<compile_context>
chip_gen: v7x
topology: tpu7x:2x2x1
jax: 0.10.0
libtpu: 0.0.40
codegen_flags: <defaults>
</compile_context>

<pallas_src>
import jax
import jax.numpy as jnp
from jax.experimental import pallas as pl
from jax.experimental.pallas import tpu as pltpu

LANES = 128
SUBLANES = 8
MAX_ROW_TILE = 2048          # (2048, 128) f32 = 1 MiB per input per buffer
MAX_CHUNKS = 2               # partial-sum chunks; 2 TCs on v7x, serialized elsewhere


def _cdiv(a, b):
    return -(-a // b)


# ------------------------------- kernel --------------------------------------

def _make_loss_kernel(n_params, is_matrix):
    """Fused kernel: tiled MSE squared-sum + all parameter L1 norms."""

    def kernel(o_ref, t_ref, *refs):
        param_refs = refs[:n_params]
        sq_ref = refs[n_params]          # (1, 8, 128) output block for this chunk
        l1_ref = refs[n_params + 1]      # (1, 8, 128) output block for this chunk
        acc_ref = refs[n_params + 2]     # (row_tile, 128) f32 VMEM accumulator

        k = pl.program_id(1)

        @pl.when(k == 0)
        def _init():
            acc_ref[...] = jnp.zeros_like(acc_ref)

        # Inner loop is pure vld + vsub + vmul + vadd (VPU only): cast in-kernel,
        # accumulate squared difference elementwise into the VMEM accumulator.
        d = o_ref[...].astype(jnp.float32) - t_ref[...].astype(jnp.float32)
        acc_ref[...] += d * d

        @pl.when(k == pl.num_programs(1) - 1)
        def _finalize():
            # Single cross-lane/sublane reduce per chunk (not per step).
            sq = jnp.sum(acc_ref[...])
            sq_ref[0] = jnp.full((SUBLANES, LANES), sq, dtype=jnp.float32)

            # torch.linalg.norm(p, 1):
            #   2-D -> max column absolute sum; 1-D -> sum of |p|.
            # Params are tiny here; they are fetched once (constant index_map).
            # TODO(synk): row-tile very large 2-D weights instead of whole-block.
            l1 = jnp.float32(0.0)
            for p_ref, is_mat in zip(param_refs, is_matrix):
                a = jnp.abs(p_ref[...].astype(jnp.float32))
                if is_mat:
                    l1 = l1 + jnp.max(jnp.sum(a, axis=0))
                else:
                    l1 = l1 + jnp.sum(a)
            l1_ref[0] = jnp.full((SUBLANES, LANES), l1, dtype=jnp.float32)

    return kernel


# ------------------------------- wrapper --------------------------------------

def _pack_param(p):
    """Preprocess a parameter: 2-D stays whole; 1-D -> zero-padded (R, 128) slab."""
    if p.ndim == 2:
        return p, True
    if p.ndim == 1:
        n = p.shape[0]
        per = SUBLANES * LANES
        padded = _cdiv(n, per) * per
        if padded != n:
            p = jnp.pad(p, (0, padded - n))        # zeros don't change sum|p|
        return p.reshape(-1, LANES), False
    # torch.linalg.norm(p, 1) raises for >2-D inputs; mirror that.
    raise ValueError("torch.linalg.norm(p, 1) requires a 1-D or 2-D input")


def l1_regularized_mse_loss(outputs, targets, params, l1_lambda):
    n_elem = outputs.size
    assert targets.size == n_elem

    rows = _cdiv(n_elem, LANES)
    # Use 2 chunks only when there is enough work for both; otherwise 1.
    num_chunks = MAX_CHUNKS if rows >= MAX_CHUNKS * SUBLANES else 1
    rows_per_chunk = _cdiv(rows, num_chunks)
    # Per-chunk row tile: multiple of 8, as big as reasonable, capped for VMEM.
    row_tile = min(MAX_ROW_TILE, SUBLANES * _cdiv(rows_per_chunk, SUBLANES))
    kt = _cdiv(rows, num_chunks * row_tile)        # reduction steps per chunk
    rows_padded = num_chunks * kt * row_tile

    def _slab(x):
        # Flatten + zero-pad to a lane-dense slab in the NATIVE dtype
        # (padded zeros contribute 0 to the squared sum; divisor is true n_elem).
        flat = x.reshape(-1)
        pad = rows_padded * LANES - flat.size
        if pad:
            flat = jnp.pad(flat, (0, pad))
        return flat.reshape(rows_padded, LANES)

    o2 = _slab(outputs)
    t2 = _slab(targets)

    packed = [_pack_param(p) for p in params]
    param_arrays = [a for a, _ in packed]
    is_matrix = tuple(flag for _, flag in packed)
    n_params = len(param_arrays)

    tile_spec = pl.BlockSpec((row_tile, LANES), lambda c, k: (c * kt + k, 0))
    param_specs = [pl.BlockSpec(a.shape, lambda c, k: (0, 0)) for a in param_arrays]
    out_spec = pl.BlockSpec((1, SUBLANES, LANES), lambda c, k: (c, 0, 0))

    sq_out, l1_out = pl.pallas_call(
        _make_loss_kernel(n_params, is_matrix),
        out_shape=(
            jax.ShapeDtypeStruct((num_chunks, SUBLANES, LANES), jnp.float32),
            jax.ShapeDtypeStruct((num_chunks, SUBLANES, LANES), jnp.float32),
        ),
        grid=(num_chunks, kt),
        in_specs=[tile_spec, tile_spec] + param_specs,
        out_specs=(out_spec, out_spec),
        scratch_shapes=[pltpu.VMEM((row_tile, LANES), jnp.float32)],
        compiler_params=pltpu.CompilerParams(
            dimension_semantics=("parallel", "arbitrary"),
            vmem_limit_bytes=32 * 1024 * 1024,
        ),
    )(o2, t2, *param_arrays)

    mse = jnp.sum(sq_out[:, 0, 0]) / jnp.float32(n_elem)
    l1_total = l1_out[0, 0, 0]          # identical value written by every chunk
    return mse + jnp.asarray(l1_lambda, jnp.float32) * l1_total


# -------------------------------- main ----------------------------------------

if __name__ == "__main__":
    key = jax.random.PRNGKey(0)
    k_o, k_t, k_w1, k_b1, k_w2, k_b2 = jax.random.split(key, 6)

    # Model outputs / targets (NCHW convention on the PyTorch side).
    outputs = jax.random.normal(k_o, (2, 4, 16, 16), dtype=jnp.float32)
    targets = jax.random.normal(k_t, (2, 4, 16, 16), dtype=jnp.float32)

    # Deterministic synthetic "model.parameters()": a tiny 2-layer MLP.
    params = [
        jax.random.normal(k_w1, (32, 16), dtype=jnp.float32) * 0.1,  # W1
        jax.random.normal(k_b1, (32,), dtype=jnp.float32) * 0.1,     # b1
        jax.random.normal(k_w2, (16, 32), dtype=jnp.float32) * 0.1,  # W2
        jax.random.normal(k_b2, (16,), dtype=jnp.float32) * 0.1,     # b2
    ]

    l1_lambda = 0.01
    loss = l1_regularized_mse_loss(outputs, targets, params, l1_lambda)
    loss = jax.block_until_ready(loss)

    # Pure-JAX reference check.
    def ref_norm1(p):
        if p.ndim == 1:
            return jnp.sum(jnp.abs(p))
        return jnp.max(jnp.sum(jnp.abs(p), axis=0))

    ref = jnp.mean((outputs - targets) ** 2) + jnp.float32(l1_lambda) * sum(
        ref_norm1(p) for p in params
    )
    assert jnp.allclose(loss, ref, rtol=1e-5, atol=1e-5), (loss, ref)

    print("KERNEL_OK")
</pallas_src>

<mosaic_0001>
module attributes {stable_mosaic.version = 11 : i64} {
  func.func @kernel(%arg0: i32, %arg1: i32, %arg2: memref<8x128xf32, #tpu.memory_space<vmem>>, %arg3: memref<8x128xf32, #tpu.memory_space<vmem>>, %arg4: memref<32x16xf32, #tpu.memory_space<vmem>>, %arg5: memref<8x128xf32, #tpu.memory_space<vmem>>, %arg6: memref<16x32xf32, #tpu.memory_space<vmem>>, %arg7: memref<8x128xf32, #tpu.memory_space<vmem>>, %arg8: memref<1x8x128xf32, #tpu.memory_space<vmem>>, %arg9: memref<1x8x128xf32, #tpu.memory_space<vmem>>, %arg10: memref<8x128xf32, #tpu.memory_space<vmem>>) attributes {dimension_semantics = [#tpu.dimension_semantics<parallel>, #tpu.dimension_semantics<arbitrary>], iteration_bounds = array<i64: 2, 1>, scalar_prefetch = 0 : i64, scratch_operands = 1 : i64, tpu.core_type = #tpu.core_type<tc>, window_params = [{transform_indices = @transform_0, window_bounds = array<i64: 8, 128>}, {transform_indices = @transform_1, window_bounds = array<i64: 8, 128>}, {pipeline_mode = #tpu.pipeline_mode<synchronous>, transform_indices = @transform_2, window_bounds = array<i64: 32, 16>}, {pipeline_mode = #tpu.pipeline_mode<synchronous>, transform_indices = @transform_3, window_bounds = array<i64: 8, 128>}, {pipeline_mode = #tpu.pipeline_mode<synchronous>, transform_indices = @transform_4, window_bounds = array<i64: 16, 32>}, {pipeline_mode = #tpu.pipeline_mode<synchronous>, transform_indices = @transform_5, window_bounds = array<i64: 8, 128>}, {transform_indices = @transform_6, window_bounds = array<i64: 1, 8, 128>}, {transform_indices = @transform_7, window_bounds = array<i64: 1, 8, 128>}]} {
    %c0_i32 = arith.constant 0 : i32
    %0 = arith.cmpi eq, %arg1, %c0_i32 : i32
    %1 = arith.extui %0 : i1 to i32
    %c0_i32_0 = arith.constant 0 : i32
    %2 = arith.cmpi ne, %1, %c0_i32_0 : i32
    scf.if %2 {
      %cst = arith.constant 0.000000e+00 : f32
      %13 = vector.broadcast %cst : f32 to vector<8x128xf32>
      %c0_10 = arith.constant 0 : index
      %c0_11 = arith.constant 0 : index
      %14 = vector.load %arg10[%c0_10, %c0_11] : memref<8x128xf32, #tpu.memory_space<vmem>>, vector<8x128xf32>
      tpu.vector_store %arg10[%c0_10, %c0_11], %13 {strides = array<i32>} : memref<8x128xf32, #tpu.memory_space<vmem>>, vector<8x128xf32>,
    } else {
    }
    %c0 = arith.constant 0 : index
    %c0_1 = arith.constant 0 : index
    %3 = vector.load %arg2[%c0, %c0_1] : memref<8x128xf32, #tpu.memory_space<vmem>>, vector<8x128xf32>
    %c0_2 = arith.constant 0 : index
    %c0_3 = arith.constant 0 : index
    %4 = vector.load %arg3[%c0_2, %c0_3] : memref<8x128xf32, #tpu.memory_space<vmem>>, vector<8x128xf32>
    %5 = arith.subf %3, %4 : vector<8x128xf32>
    %c0_4 = arith.constant 0 : index
    %c0_5 = arith.constant 0 : index
    %6 = vector.load %arg10[%c0_4, %c0_5] : memref<8x128xf32, #tpu.memory_space<vmem>>, vector<8x128xf32>
    %7 = arith.mulf %5, %5 : vector<8x128xf32>
    %8 = arith.addf %6, %7 : vector<8x128xf32>
    %c0_6 = arith.constant 0 : index
    %c0_7 = arith.constant 0 : index
    %9 = vector.load %arg10[%c0_6, %c0_7] : memref<8x128xf32, #tpu.memory_space<vmem>>, vector<8x128xf32>
    tpu.vector_store %arg10[%c0_6, %c0_7], %8 {strides = array<i32>} : memref<8x128xf32, #tpu.memory_space<vmem>>, vector<8x128xf32>,
    %c0_i32_8 = arith.constant 0 : i32
    %10 = arith.cmpi eq, %arg1, %c0_i32_8 : i32
    %11 = arith.extui %10 : i1 to i32
    %c0_i32_9 = arith.constant 0 : i32
    %12 = arith.cmpi ne, %11, %c0_i32_9 : i32
    scf.if %12 {
      %c0_10 = arith.constant 0 : index
      %c0_11 = arith.constant 0 : index
      %13 = vector.load %arg10[%c0_10, %c0_11] : memref<8x128xf32, #tpu.memory_space<vmem>>, vector<8x128xf32>
      %14 = vector.shape_cast %13 : vector<8x128xf32> to vector<1x8x128xf32>
      %cst = arith.constant dense<0.000000e+00> : vector<1xf32>
      %15 = vector.multi_reduction <add>, %14, %cst [1, 2] : vector<1x8x128xf32> to vector<1xf32>
      %16 = vector.shape_cast %15 : vector<1xf32> to vector<1x1x1xf32>
      %17 = vector.extract %16[0, 0, 0] : f32 from vector<1x1x1xf32>
      %18 = vector.broadcast %17 : f32 to vector<8x128xf32>
      %c0_12 = arith.constant 0 : index
      %c0_13 = arith.constant 0 : index
      %c0_14 = arith.constant 0 : index
      %19 = vector.load %arg8[%c0_12, %c0_13, %c0_14] : memref<1x8x128xf32, #tpu.memory_space<vmem>>, vector<1x8x128xf32>
      %20 = vector.shape_cast %19 : vector<1x8x128xf32> to vector<8x128xf32>
      %21 = vector.shape_cast %18 : vector<8x128xf32> to vector<1x8x128xf32>
      tpu.vector_store %arg8[%c0_12, %c0_13, %c0_14], %21 {strides = array<i32>} : memref<1x8x128xf32, #tpu.memory_space<vmem>>, vector<1x8x128xf32>,
      %c0_15 = arith.constant 0 : index
      %c0_16 = arith.constant 0 : index
      %22 = vector.load %arg4[%c0_15, %c0_16] : memref<32x16xf32, #tpu.memory_space<vmem>>, vector<32x16xf32>
      %23 = math.absf %22 : vector<32x16xf32>
      %cst_17 = arith.constant dense<0.000000e+00> : vector<16xf32>
      %24 = vector.multi_reduction <add>, %23, %cst_17 [0] : vector<32x16xf32> to vector<16xf32>
      %25 = vector.shape_cast %24 : vector<16xf32> to vector<1x16xf32>
      %cst_18 = arith.constant dense<0xFF800000> : vector<1xf32>
      %26 = vector.multi_reduction <maximumf>, %25, %cst_18 [1] : vector<1x16xf32> to vector<1xf32>
      %27 = vector.shape_cast %26 : vector<1xf32> to vector<1x1xf32>
      %28 = vector.extract %27[0, 0] : f32 from vector<1x1xf32>
      %cst_19 = arith.constant 0.000000e+00 : f32
      %29 = arith.addf %cst_19, %28 : f32
      %c0_20 = arith.constant 0 : index
      %c0_21 = arith.constant 0 : index
      %30 = vector.load %arg5[%c0_20, %c0_21] : memref<8x128xf32, #tpu.memory_space<vmem>>, vector<8x128xf32>
      %31 = math.absf %30 : vector<8x128xf32>
      %32 = vector.shape_cast %31 : vector<8x128xf32> to vector<1x8x128xf32>
      %cst_22 = arith.constant dense<0.000000e+00> : vector<1xf32>
      %33 = vector.multi_reduction <add>, %32, %cst_22 [1, 2] : vector<1x8x128xf32> to vector<1xf32>
      %34 = vector.shape_cast %33 : vector<1xf32> to vector<1x1x1xf32>
      %35 = vector.extract %34[0, 0, 0] : f32 from vector<1x1x1xf32>
      %36 = arith.addf %29, %35 : f32
      %c0_23 = arith.constant 0 : index
      %c0_24 = arith.constant 0 : index
      %37 = vector.load %arg6[%c0_23, %c0_24] : memref<16x32xf32, #tpu.memory_space<vmem>>, vector<16x32xf32>
      %38 = math.absf %37 : vector<16x32xf32>
      %cst_25 = arith.constant dense<0.000000e+00> : vector<32xf32>
      %39 = vector.multi_reduction <add>, %38, %cst_25 [0] : vector<16x32xf32> to vector<32xf32>
      %40 = vector.shape_cast %39 : vector<32xf32> to vector<1x32xf32>
      %cst_26 = arith.constant dense<0xFF800000> : vector<1xf32>
      %41 = vector.multi_reduction <maximumf>, %40, %cst_26 [1] : vector<1x32xf32> to vector<1xf32>
      %42 = vector.shape_cast %41 : vector<1xf32> to vector<1x1xf32>
      %43 = vector.extract %42[0, 0] : f32 from vector<1x1xf32>
      %44 = arith.addf %36, %43 : f32
      %c0_27 = arith.constant 0 : index
      %c0_28 = arith.constant 0 : index
      %45 = vector.load %arg7[%c0_27, %c0_28] : memref<8x128xf32, #tpu.memory_space<vmem>>, vector<8x128xf32>
      %46 = math.absf %45 : vector<8x128xf32>
      %47 = vector.shape_cast %46 : vector<8x128xf32> to vector<1x8x128xf32>
      %cst_29 = arith.constant dense<0.000000e+00> : vector<1xf32>
      %48 = vector.multi_reduction <add>, %47, %cst_29 [1, 2] : vector<1x8x128xf32> to vector<1xf32>
      %49 = vector.shape_cast %48 : vector<1xf32> to vector<1x1x1xf32>
      %50 = vector.extract %49[0, 0, 0] : f32 from vector<1x1x1xf32>
      %51 = arith.addf %44, %50 : f32
      %52 = vector.broadcast %51 : f32 to vector<8x128xf32>
      %c0_30 = arith.constant 0 : index
      %c0_31 = arith.constant 0 : index
      %c0_32 = arith.constant 0 : index
      %53 = vector.load %arg9[%c0_30, %c0_31, %c0_32] : memref<1x8x128xf32, #tpu.memory_space<vmem>>, vector<1x8x128xf32>
      %54 = vector.shape_cast %53 : vector<1x8x128xf32> to vector<8x128xf32>
      %55 = vector.shape_cast %52 : vector<8x128xf32> to vector<1x8x128xf32>
      tpu.vector_store %arg9[%c0_30, %c0_31, %c0_32], %55 {strides = array<i32>} : memref<1x8x128xf32, #tpu.memory_space<vmem>>, vector<1x8x128xf32>,
    } else {
    }
    return
  }
  func.func @transform_0(%arg0: i32, %arg1: i32) -> (i32, i32) {
    %c1_i32 = arith.constant 1 : i32
    %0 = arith.muli %arg0, %c1_i32 : i32
    %1 = arith.addi %0, %arg1 : i32
    %c0_i32 = arith.constant 0 : i32
    %c0_i32_0 = arith.constant 0 : i32
    return %1, %c0_i32 : i32, i32
  }
  func.func @transform_1(%arg0: i32, %arg1: i32) -> (i32, i32) {
    %c1_i32 = arith.constant 1 : i32
    %0 = arith.muli %arg0, %c1_i32 : i32
    %1 = arith.addi %0, %arg1 : i32
    %c0_i32 = arith.constant 0 : i32
    %c0_i32_0 = arith.constant 0 : i32
    return %1, %c0_i32 : i32, i32
  }
  func.func @transform_2(%arg0: i32, %arg1: i32) -> (i32, i32) {
    %c0_i32 = arith.constant 0 : i32
    %c0_i32_0 = arith.constant 0 : i32
    %c0_i32_1 = arith.constant 0 : i32
    return %c0_i32, %c0_i32_0 : i32, i32
  }
  func.func @transform_3(%arg0: i32, %arg1: i32) -> (i32, i32) {
    %c0_i32 = arith.constant 0 : i32
    %c0_i32_0 = arith.constant 0 : i32
    %c0_i32_1 = arith.constant 0 : i32
    return %c0_i32, %c0_i32_0 : i32, i32
  }
  func.func @transform_4(%arg0: i32, %arg1: i32) -> (i32, i32) {
    %c0_i32 = arith.constant 0 : i32
    %c0_i32_0 = arith.constant 0 : i32
    %c0_i32_1 = arith.constant 0 : i32
    return %c0_i32, %c0_i32_0 : i32, i32
  }
  func.func @transform_5(%arg0: i32, %arg1: i32) -> (i32, i32) {
    %c0_i32 = arith.constant 0 : i32
    %c0_i32_0 = arith.constant 0 : i32
    %c0_i32_1 = arith.constant 0 : i32
    return %c0_i32, %c0_i32_0 : i32, i32
  }
  func.func @transform_6(%arg0: i32, %arg1: i32) -> (i32, i32, i32) {
    %c0_i32 = arith.constant 0 : i32
    %c0_i32_0 = arith.constant 0 : i32
    %c0_i32_1 = arith.constant 0 : i32
    return %arg0, %c0_i32, %c0_i32_0 : i32, i32, i32
  }
  func.func @transform_7(%arg0: i32, %arg1: i32) -> (i32, i32, i32) {
    %c0_i32 = arith.constant 0 : i32
    %c0_i32_0 = arith.constant 0 : i32
    %c0_i32_1 = arith.constant 0 : i32
    return %arg0, %c0_i32, %c0_i32_0 : i32, i32, i32
  }
}

</mosaic_0001>

<llo_original>
// kernel: tpu_custom_call.1
$region0: #{tpu_custom_call.1}
  #allocation0 [shape = 'u32[]', space=smem, size = 0x4, offset = 0x4, fixed_abs, tag = 'smem constant byte address 0x4 - core index']
  #allocation1 [shape = 'u32[144,128]{1,0:T(1,128)}', space=vmem, size = 0x12000, scoped, tag = 'internal scratch']
  #allocation2 [shape = 'f32[8,128]{1,0:T(8,128)}', space=vmem, size = 0x1000, scoped, tag = 'scratch operand']
  %s0 = inlined_call_operand.vmem [shape: f32[16,128], index: 0, kind: input, shape index: {}]
  %s1 = inlined_call_operand.vmem [shape: f32[16,128], index: 1, kind: input, shape index: {}]
  %s2 = inlined_call_operand.vmem [shape: f32[32,16], index: 2, kind: input, shape index: {}]
  %s3 = inlined_call_operand.vmem [shape: f32[8,128], index: 3, kind: input, shape index: {}]
  %s4 = inlined_call_operand.vmem [shape: f32[16,32], index: 4, kind: input, shape index: {}]
  %s5 = inlined_call_operand.vmem [shape: f32[8,128], index: 5, kind: input, shape index: {}]
  %s6 = inlined_call_operand.hbm [shape: f32[2,8,128], index: 6, kind: output, shape index: {0}]
  %s7 = inlined_call_operand.hbm [shape: f32[2,8,128], index: 7, kind: output, shape index: {1}]
  %8 = xla_tuple %s6, %s7
  %s9 = sld [smem:[#allocation0]]
  $region73: #{tpu_custom_call.1} parent=0
    _
  %s11 = ssub.s32 1, %s9
  %s12 = scalar_select 0, %s11, %s9
  $region1: #{tpu_custom_call.1} parent=0
    #allocation3 [shape = 'u8[8192]{0}', space=vmem, size = 0x2000, scoped, tag = 'output window, operand 0']
    #allocation4 [shape = 's32[2]{0}', space=sflag, size = 0x8, scoped, tag = 'scoped memory for tpu_custom_call.1']
    #allocation5 [shape = 'u8[8192]{0}', space=vmem, size = 0x2000, scoped, tag = 'output window, operand 1']
    #allocation6 [shape = 's32[2]{0}', space=sflag, size = 0x8, scoped, tag = 'scoped memory for tpu_custom_call.1']
    %13 = vsyncpa [#allocation4], 0
    %s14 = scalar_lea.sflag [#allocation4], 1
    %15 = vsyncpa %s14, 0
    %16 = vsyncpa [#allocation6], 0
    %s17 = scalar_lea.sflag [#allocation6], 1
    %18 = vsyncpa %s17, 0
    loop: start=0, step=1, limit=4
    $region2: #{tpu_custom_call.1} parent=1 // loop_pre_header
      _
    $region3: #{tpu_custom_call.1} parent=1 // loop_header
      %s20 = sphi 0, %s24
      %p21 = scmp.ge.s32.totalorder %s20, 4
      %s27 = sphi 0, %s39
      %s28 = sphi 0, %s35
      %s29 = sphi 0, %s27
      %s30 = sphi 0, %s28
      %s31 = sphi 0, %s29
      %s32 = sphi 0, %s30
      %s44 = sphi 0, %s46
      %s47 = sphi 0, %s44
      %s48 = sphi 0, %s47
      %s64 = sphi 0, %s48
      %s72 = sphi 0, %s74
      %s75 = sphi 0, %s72
      %s76 = sphi 0, %s75
      %s92 = sphi 0, %s76
      %s96 = sphi 0, %s96
      %s98 = sphi 0, %s96
      %s99 = sphi 0, %s98
      %s113 = sphi 0, %s99
      %s117 = sphi 0, %s117
      %s119 = sphi 0, %s117
      %s120 = sphi 0, %s119
      %s134 = sphi 0, %s120
      %s138 = sphi 0, %s138
      %s140 = sphi 0, %s138
      %s141 = sphi 0, %s140
      %s155 = sphi 0, %s141
      %s159 = sphi 0, %s159
      %s161 = sphi 0, %s159
      %s162 = sphi 0, %s161
      %s176 = sphi 0, %s162
      %s182 = sphi 0, %s184
      %s185 = sphi 0, %s182
      %s186 = sphi 0, %s185
      %s202 = sphi 0, %s186
      %s208 = sphi 0, %s210
      %s211 = sphi 0, %s208
      %s212 = sphi 0, %s211
      %s228 = sphi 0, %s212
    $region4: #{tpu_custom_call.1} parent=1 // loop_header_branch
      %23 = sbr.rel (%p21) target = $region8
    $region5: #{tpu_custom_call.1} parent=1 // loop_body
      %s25 = ssub.s32 %s20, 1
      %s26 = ssub.s32 %s20, 2
      %s33 = sadd.s32 1, %s28
      %p34 = scmp.ge.s32.totalorder %s33, 1
      %s35 = scalar_select %p34, 0, %s33
      %s36 = sadd.s32 1, %s27
      %s37 = scalar_select %p34, %s36, %s27
      %p38 = scmp.ge.s32.totalorder %s37, 2
      %s39 = scalar_select %p38, 0, %s37
      %s40 = sadd.s32 %s27, %s28
      %s41 = sadd.s32 %s39, %s35
      %s42 = ssub.s32 %s40, %s41
      %p43 = scmp.eq.s32.totalorder %s42, 0
      %s45 = sadd.s32 %s44, 1
      %s46 = scalar_select %p43, %s44, %s45
      %p49 = pneg %p43
      %p50 = scmp.eq.s32.totalorder %s20, 1
      %p51 = por %p49, %p50
      %p52 = scmp.ne.s32.totalorder %s44, %s47
      %p53 = scmp.eq.s32.totalorder %s20, 0
      %p54 = por %p52, %p53
      %p55 = scmp.ne.s32.totalorder %s44, %s47
      %p56 = scmp.eq.s32.totalorder %s25, 1
      %p57 = por %p55, %p56
      %p58 = scmp.ne.s32.totalorder %s47, %s48
      %p59 = scmp.eq.s32.totalorder %s25, 0
      %p60 = por %p58, %p59
      %p61 = scmp.ne.s32.totalorder %s47, %s48
      %p62 = scmp.eq.s32.totalorder %s26, 1
      %p63 = por %p61, %p62
      %p65 = scmp.ne.s32.totalorder %s48, %s64
      %p66 = scmp.eq.s32.totalorder %s26, 0
      %p67 = por %p65, %p66
      %s68 = sadd.s32 %s27, %s28
      %s69 = sadd.s32 %s39, %s35
      %s70 = ssub.s32 %s68, %s69
      %p71 = scmp.eq.s32.totalorder %s70, 0
      %s73 = sadd.s32 %s72, 1
      %s74 = scalar_select %p71, %s72, %s73
      %p77 = pneg %p71
      %p78 = scmp.eq.s32.totalorder %s20, 1
      %p79 = por %p77, %p78
      %p80 = scmp.ne.s32.totalorder %s72, %s75
      %p81 = scmp.eq.s32.totalorder %s20, 0
      %p82 = por %p80, %p81
      %p83 = scmp.ne.s32.totalorder %s72, %s75
      %p84 = scmp.eq.s32.totalorder %s25, 1
      %p85 = por %p83, %p84
      %p86 = scmp.ne.s32.totalorder %s75, %s76
      %p87 = scmp.eq.s32.totalorder %s25, 0
      %p88 = por %p86, %p87
      %p89 = scmp.ne.s32.totalorder %s75, %s76
      %p90 = scmp.eq.s32.totalorder %s26, 1
      %p91 = por %p89, %p90
      %p93 = scmp.ne.s32.totalorder %s76, %s92
      %p94 = scmp.eq.s32.totalorder %s26, 0
      %p95 = por %p93, %p94
      %s97 = sadd.s32 %s96, 1
      %p100 = scmp.eq.s32.totalorder %s20, 1
      %p101 = scmp.ne.s32.totalorder %s96, %s98
      %p102 = scmp.eq.s32.totalorder %s20, 0
      %p103 = por %p101, %p102
      %p104 = scmp.ne.s32.totalorder %s96, %s98
      %p105 = scmp.eq.s32.totalorder %s25, 1
      %p106 = por %p104, %p105
      %p107 = scmp.ne.s32.totalorder %s98, %s99
      %p108 = scmp.eq.s32.totalorder %s25, 0
      %p109 = por %p107, %p108
      %p110 = scmp.ne.s32.totalorder %s98, %s99
      %p111 = scmp.eq.s32.totalorder %s26, 1
      %p112 = por %p110, %p111
      %p114 = scmp.ne.s32.totalorder %s99, %s113
      %p115 = scmp.eq.s32.totalorder %s26, 0
      %p116 = por %p114, %p115
      %s118 = sadd.s32 %s117, 1
      %p121 = scmp.eq.s32.totalorder %s20, 1
      %p122 = scmp.ne.s32.totalorder %s117, %s119
      %p123 = scmp.eq.s32.totalorder %s20, 0
      %p124 = por %p122, %p123
      %p125 = scmp.ne.s32.totalorder %s117, %s119
      %p126 = scmp.eq.s32.totalorder %s25, 1
      %p127 = por %p125, %p126
      %p128 = scmp.ne.s32.totalorder %s119, %s120
      %p129 = scmp.eq.s32.totalorder %s25, 0
      %p130 = por %p128, %p129
      %p131 = scmp.ne.s32.totalorder %s119, %s120
      %p132 = scmp.eq.s32.totalorder %s26, 1
      %p133 = por %p131, %p132
      %p135 = scmp.ne.s32.totalorder %s120, %s134
      %p136 = scmp.eq.s32.totalorder %s26, 0
      %p137 = por %p135, %p136
      %s139 = sadd.s32 %s138, 1
      %p142 = scmp.eq.s32.totalorder %s20, 1
      %p143 = scmp.ne.s32.totalorder %s138, %s140
      %p144 = scmp.eq.s32.totalorder %s20, 0
      %p145 = por %p143, %p144
      %p146 = scmp.ne.s32.totalorder %s138, %s140
      %p147 = scmp.eq.s32.totalorder %s25, 1
      %p148 = por %p146, %p147
      %p149 = scmp.ne.s32.totalorder %s140, %s141
      %p150 = scmp.eq.s32.totalorder %s25, 0
      %p151 = por %p149, %p150
      %p152 = scmp.ne.s32.totalorder %s140, %s141
      %p153 = scmp.eq.s32.totalorder %s26, 1
      %p154 = por %p152, %p153
      %p156 = scmp.ne.s32.totalorder %s141, %s155
      %p157 = scmp.eq.s32.totalorder %s26, 0
      %p158 = por %p156, %p157
      %s160 = sadd.s32 %s159, 1
      %p163 = scmp.eq.s32.totalorder %s20, 1
      %p164 = scmp.ne.s32.totalorder %s159, %s161
      %p165 = scmp.eq.s32.totalorder %s20, 0
      %p166 = por %p164, %p165
      %p167 = scmp.ne.s32.totalorder %s159, %s161
      %p168 = scmp.eq.s32.totalorder %s25, 1
      %p169 = por %p167, %p168
      %p170 = scmp.ne.s32.totalorder %s161, %s162
      %p171 = scmp.eq.s32.totalorder %s25, 0
      %p172 = por %p170, %p171
      %p173 = scmp.ne.s32.totalorder %s161, %s162
      %p174 = scmp.eq.s32.totalorder %s26, 1
      %p175 = por %p173, %p174
      %p177 = scmp.ne.s32.totalorder %s162, %s176
      %p178 = scmp.eq.s32.totalorder %s26, 0
      %p179 = por %p177, %p178
      %s180 = ssub.s32 %s27, %s39
      %p181 = scmp.eq.s32.totalorder %s180, 0
      %s183 = sadd.s32 %s182, 1
      %s184 = scalar_select %p181, %s182, %s183
      %p187 = pneg %p181
      %p188 = scmp.eq.s32.totalorder %s20, 1
      %p189 = por %p187, %p188
      %p190 = scmp.ne.s32.totalorder %s182, %s185
      %p191 = scmp.eq.s32.totalorder %s20, 0
      %p192 = por %p190, %p191
      %p193 = scmp.ne.s32.totalorder %s182, %s185
      %p194 = scmp.eq.s32.totalorder %s25, 1
      %p195 = por %p193, %p194
      %p196 = scmp.ne.s32.totalorder %s185, %s186
      %p197 = scmp.eq.s32.totalorder %s25, 0
      %p198 = por %p196, %p197
      %p199 = scmp.ne.s32.totalorder %s185, %s186
      %p200 = scmp.eq.s32.totalorder %s26, 1
      %p201 = por %p199, %p200
      %p203 = scmp.ne.s32.totalorder %s186, %s202
      %p204 = scmp.eq.s32.totalorder %s26, 0
      %p205 = por %p203, %p204
      %s206 = ssub.s32 %s27, %s39
      %p207 = scmp.eq.s32.totalorder %s206, 0
      %s209 = sadd.s32 %s208, 1
      %s210 = scalar_select %p207, %s208, %s209
      %p213 = pneg %p207
      %p214 = scmp.eq.s32.totalorder %s20, 1
      %p215 = por %p213, %p214
      %p216 = scmp.ne.s32.totalorder %s208, %s211
      %p217 = scmp.eq.s32.totalorder %s20, 0
      %p218 = por %p216, %p217
      %p219 = scmp.ne.s32.totalorder %s208, %s211
      %p220 = scmp.eq.s32.totalorder %s25, 1
      %p221 = por %p219, %p220
      %p222 = scmp.ne.s32.totalorder %s211, %s212
      %p223 = scmp.eq.s32.totalorder %s25, 0
      %p224 = por %p222, %p223
      %p225 = scmp.ne.s32.totalorder %s211, %s212
      %p226 = scmp.eq.s32.totalorder %s26, 1
      %p227 = por %p225, %p226
      %p229 = scmp.ne.s32.totalorder %s212, %s228
      %p230 = scmp.eq.s32.totalorder %s26, 0
      %p231 = por %p229, %p230
      %p232 = scmp.le.s32.totalorder 1, %s20
      %p233 = scmp.lt.s32.totalorder %s20, 3
      %p234 = pnand %p232, %p233
      %p235 = pneg %p234
      // Predicated region
      $region9: #{tpu_custom_call.1} parent=5 // pred_check
        _
      $region10: #{tpu_custom_call.1} parent=5 // pred_check_branch
        %237 = sbr.rel (%p234) target = $region12
      $region11: #{tpu_custom_call.1} parent=5 // pred_region
        %s238 = ssub.s32 %s20, 1
        // Predicated region
        $region13: #{tpu_custom_call.1} parent=11 // pred_check
          %p239 = pneg %p109
        $region14: #{tpu_custom_call.1} parent=11 // pred_check_branch
          %241 = sbr.rel (%p239) target = $region16
        $region15: #{tpu_custom_call.1} parent=11 // pred_region
          _
        $region16: #{tpu_custom_call.1} parent=11 // pred_fallthru
          _
        // Predicated region
        $region17: #{tpu_custom_call.1} parent=11 // pred_check
          %p242 = pneg %p130
        $region18: #{tpu_custom_call.1} parent=11 // pred_check_branch
          %244 = sbr.rel (%p242) target = $region20
        $region19: #{tpu_custom_call.1} parent=11 // pred_region
          _
        $region20: #{tpu_custom_call.1} parent=11 // pred_fallthru
          _
        // Predicated region
        $region21: #{tpu_custom_call.1} parent=11 // pred_check
          %p245 = pneg %p151
        $region22: #{tpu_custom_call.1} parent=11 // pred_check_branch
          %247 = sbr.rel (%p245) target = $region24
        $region23: #{tpu_custom_call.1} parent=11 // pred_region
          _
        $region24: #{tpu_custom_call.1} parent=11 // pred_fallthru
          _
        // Predicated region
        $region25: #{tpu_custom_call.1} parent=11 // pred_check
          %p248 = pneg %p172
        $region26: #{tpu_custom_call.1} parent=11 // pred_check_branch
          %250 = sbr.rel (%p248) target = $region28
        $region27: #{tpu_custom_call.1} parent=11 // pred_region
          _
        $region28: #{tpu_custom_call.1} parent=11 // pred_fallthru
          _
      $region12: #{tpu_custom_call.1} parent=5 // pred_fallthru
        _
      %p251 = scmp.lt.s32.totalorder %s20, 2
      // Predicated region
      $region29: #{tpu_custom_call.1} parent=5 // pred_check
        %p252 = pneg %p251
      $region30: #{tpu_custom_call.1} parent=5 // pred_check_branch
        %254 = sbr.rel (%p252) target = $region32
      $region31: #{tpu_custom_call.1} parent=5 // pred_region
        // Predicated region
        $region33: #{tpu_custom_call.1} parent=31 // pred_check
          %p255 = pneg %p54
        $region34: #{tpu_custom_call.1} parent=31 // pred_check_branch
          %257 = sbr.rel (%p255) target = $region36
        $region35: #{tpu_custom_call.1} parent=31 // pred_region
          %s258 = sadd.s32 %s27, %s28
          %p259 = scmp.lt.s32.totalorder %s258, 1
          %s260 = scalar_select %p259, %s258, 1
          %s261 = smul.addr %s260, 8
          %s262 = scalar_lea.vmem %s0, %s261
          %s263 = sadd.s32 %s27, %s28
        $region36: #{tpu_custom_call.1} parent=31 // pred_fallthru
          _
        // Predicated region
        $region37: #{tpu_custom_call.1} parent=31 // pred_check
          %p264 = pneg %p82
        $region38: #{tpu_custom_call.1} parent=31 // pred_check_branch
          %266 = sbr.rel (%p264) target = $region40
        $region39: #{tpu_custom_call.1} parent=31 // pred_region
          %s267 = sadd.s32 %s27, %s28
          %p268 = scmp.lt.s32.totalorder %s267, 1
          %s269 = scalar_select %p268, %s267, 1
          %s270 = smul.addr %s269, 8
          %s271 = scalar_lea.vmem %s1, %s270
          %s272 = sadd.s32 %s27, %s28
        $region40: #{tpu_custom_call.1} parent=31 // pred_fallthru
          _
      $region32: #{tpu_custom_call.1} parent=5 // pred_fallthru
        _
      %p273 = scmp.le.s32.totalorder 1, %s20
      %p274 = scmp.lt.s32.totalorder %s20, 3
      %p275 = pnand %p273, %p274
      %p276 = pneg %p275
      // Predicated region
      $region41: #{tpu_custom_call.1} parent=5 // pred_check
        _
      $region42: #{tpu_custom_call.1} parent=5 // pred_check_branch
        %278 = sbr.rel (%p275) target = $region44
      $region43: #{tpu_custom_call.1} parent=5 // pred_region
        %s279 = ssub.s32 %s20, 1
        %s280 = sadd.s32 %s29, %s30
        %p281 = scmp.lt.s32.totalorder %s280, 1
        %s282 = scalar_select %p281, %s280, 1
        %s283 = smul.addr %s282, 8
        %s284 = scalar_lea.vmem %s0, %s283
        %p285 = pneg %p60
        %p286 = pneg %p57
        %s287 = sadd.s32 %s29, %s30
        %p288 = scmp.lt.s32.totalorder %s287, 1
        %s289 = scalar_select %p288, %s287, 1
        %s290 = smul.addr %s289, 8
        %s291 = scalar_lea.vmem %s1, %s290
        %p292 = pneg %p88
        %p293 = pneg %p85
        %p294 = pneg %p109
        %p295 = pneg %p106
        %p296 = pneg %p130
        %p297 = pneg %p127
        %p298 = pneg %p151
        %p299 = pneg %p148
        %p300 = pneg %p172
        %p301 = pneg %p169
        %p302 = pneg %p198
        %p303 = pneg %p195
        %s304 = sand.u32 %s185, 1
        %s305 = scalar_lea.sflag [#allocation4], %s304
        %s306 = sand.u32 %s185, 1
        %s307 = smul.addr %s306, 8
        %s308 = scalar_lea.vmem [#allocation3], %s307
        %p309 = pneg %p224
        %p310 = pneg %p221
        %s311 = sand.u32 %s211, 1
        %s312 = scalar_lea.sflag [#allocation6], %s311
        %s313 = sand.u32 %s211, 1
        %s314 = smul.addr %s313, 8
        %s315 = scalar_lea.vmem [#allocation5], %s314
        %s316 = sadd.s32 %s29, %s30
        %p317 = scmp.lt.s32.totalorder %s316, 1
        %s318 = scalar_select %p317, %s316, 1
        %s319 = smul.addr %s318, 8
        %s320 = scalar_lea.vmem %s0, %s319
        %s321 = sadd.s32 %s29, %s30
        %s322 = sadd.s32 %s29, %s30
        %p323 = scmp.lt.s32.totalorder %s322, 1
        %s324 = scalar_select %p323, %s322, 1
        %s325 = smul.addr %s324, 8
        %s326 = scalar_lea.vmem %s1, %s325
        %s327 = sadd.s32 %s29, %s30
        %p328 = scmp.eq.s32.totalorder %s30, 0
        // Predicated region
        $region45: #{tpu_custom_call.1} parent=43 // pred_check
          %p329 = pneg %p328
        $region46: #{tpu_custom_call.1} parent=43 // pred_check_branch
          %331 = sbr.rel (%p329) target = $region48
        $region47: #{tpu_custom_call.1} parent=43 // pred_region
          %332 = vst [vmem:[#allocation2] sm:$0xff] 0.0
        $region48: #{tpu_custom_call.1} parent=43 // pred_fallthru
          _
        %v333 = vld [vmem:[%s320] sm:$0xff]
        %v334 = vld [vmem:[%s326] sm:$0xff]
        %v335 = vsub.f32 %v333, %v334
        %v336 = vld [vmem:[#allocation2] sm:$0xff]
        %v337 = vmul.f32 %v335, %v335
        %v338 = vadd.f32 %v336, %v337
        %339 = vst [vmem:[#allocation2] sm:$0xff] %v338
        // Predicated region
        $region49: #{tpu_custom_call.1} parent=43 // pred_check
          %p340 = pneg %p328
        $region50: #{tpu_custom_call.1} parent=43 // pred_check_branch
          %342 = sbr.rel (%p340) target = $region52
        $region51: #{tpu_custom_call.1} parent=43 // pred_region
          %v343 = vld [vmem:[#allocation2] sm:$0xff]
          %344 = vadd.xlane.f32.xlu0 %v343
          %v345 = vpop.xlane.xlu0 %344
          %v346 = vrot.slane %v345, 4
          %v347 = vadd.f32 %v345, %v346
          %v348 = vrot.slane %v347, 2
          %v349 = vadd.f32 %v347, %v348
          %v350 = vrot.slane %v349, 1
          %v351 = vadd.f32 %v349, %v350
          %s352 = vtos %v351
          %v353 = vstv %s352
          %354 = vst [vmem:[%s308] sm:$0xff] %v353
          %v355 = vld [vmem:[%s2] sm:$0xff]
          %v356 = vld [vmem:[%s2 + $0x8] sm:$0xff]
          %v357 = vld [vmem:[%s2 + $0x10] sm:$0xff]
          %v358 = vld [vmem:[%s2 + $0x18] sm:$0xff]
          %v359 = vand.u32 2147483647, %v355
          %v360 = vand.u32 2147483647, %v356
          %v361 = vand.u32 2147483647, %v357
          %v362 = vand.u32 2147483647, %v358
          %vm363 = vcmask 130048
          %v364 = vsel %vm363, %v359, 0.0
          %v365 = vsel %vm363, %v360, 0.0
          %v366 = vadd.f32 %v364, %v365
          %v367 = vsel %vm363, %v361, 0.0
          %v368 = vadd.f32 %v366, %v367
          %v369 = vsel %vm363, %v362, 0.0
          %v370 = vadd.f32 %v368, %v369
          %v371 = vrot.slane %v370, 4
          %v372 = vadd.f32 %v370, %v371
          %v373 = vrot.slane %v372, 2
          %v374 = vadd.f32 %v372, %v373
          %v375 = vrot.slane %v374, 1
          %v376 = vadd.f32 %v374, %v375
          %v377 = vsel %vm363, %v376, -inf
          %378 = vmax.xlane.f32.xlu0 %v377
          %v379 = vpop.xlane.xlu0 %378
          %s380 = vtos %v379
          %s381 = sadd.f32 %s380, 0.0
          %v382 = vld [vmem:[%s3] sm:$0xff]
          %v383 = vand.u32 2147483647, %v382
          %384 = vadd.xlane.f32.xlu0 %v383
          %v385 = vpop.xlane.xlu0 %384
          %v386 = vrot.slane %v385, 4
          %v387 = vadd.f32 %v385, %v386
          %v388 = vrot.slane %v387, 2
          %v389 = vadd.f32 %v387, %v388
          %v390 = vrot.slane %v389, 1
          %v391 = vadd.f32 %v389, %v390
          %s392 = vtos %v391
          %s393 = sadd.f32 %s381, %s392
          %v394 = vld [vmem:[%s4] sm:$0xff]
          %v395 = vld [vmem:[%s4 + $0x8] sm:$0xff]
          %v396 = vand.u32 2147483647, %v394
          %v397 = vand.u32 2147483647, %v395
          %vm398 = vcmask 261120
          %v399 = vsel %vm398, %v396, 0.0
          %v400 = vsel %vm398, %v397, 0.0
          %v401 = vadd.f32 %v399, %v400
          %v402 = vrot.slane %v401, 4
          %v403 = vadd.f32 %v401, %v402
          %v404 = vrot.slane %v403, 2
          %v405 = vadd.f32 %v403, %v404
          %v406 = vrot.slane %v405, 1
          %v407 = vadd.f32 %v405, %v406
          %v408 = vsel %vm398, %v407, -inf
          %409 = vmax.xlane.f32.xlu0 %v408
          %v410 = vpop.xlane.xlu0 %409
          %s411 = vtos %v410
          %s412 = sadd.f32 %s393, %s411
          %v413 = vld [vmem:[%s5] sm:$0xff]
          %v414 = vand.u32 2147483647, %v413
          %415 = vadd.xlane.f32.xlu0 %v414
          %v416 = vpop.xlane.xlu0 %415
          %v417 = vrot.slane %v416, 4
          %v418 = vadd.f32 %v416, %v417
          %v419 = vrot.slane %v418, 2
          %v420 = vadd.f32 %v418, %v419
          %v421 = vrot.slane %v420, 1
          %v422 = vadd.f32 %v420, %v421
          %s423 = vtos %v422
          %s424 = sadd.f32 %s412, %s423
          %v425 = vstv %s424
          %426 = vst [vmem:[%s315] sm:$0xff] %v425
        $region52: #{tpu_custom_call.1} parent=43 // pred_fallthru
          _
        %s427 = sand.u32 %s185, 1
        %s428 = scalar_lea.sflag [#allocation4], %s427
        %s429 = sand.u32 %s185, 1
        %s430 = smul.addr %s429, 8
        %s431 = scalar_lea.vmem [#allocation3], %s430
        %s432 = sand.u32 %s211, 1
        %s433 = scalar_lea.sflag [#allocation6], %s432
        %s434 = sand.u32 %s211, 1
        %s435 = smul.addr %s434, 8
        %s436 = scalar_lea.vmem [#allocation5], %s435
        // Predicated region
        $region53: #{tpu_custom_call.1} parent=43 // pred_check
          %p437 = pneg %p195
        $region54: #{tpu_custom_call.1} parent=43 // pred_check_branch
          %439 = sbr.rel (%p437) target = $region56
        $region55: #{tpu_custom_call.1} parent=43 // pred_region
          %s441 = ssub.s32 128, 128
          %442 = vsyncadd %s428, %s441
          %s443 = smul.addr %s29, 128
          %s444 = scalar_lea.hbm %s6, %s443
          %s446 = sshll.u32 %s431, 4
          %s447 = int_to_ptr.vmem [resolvable:$true] %s446
          %449 = dma.vmem_to_hbm [thread:$0]  %s447, 128, %s444, %s428
        $region56: #{tpu_custom_call.1} parent=43 // pred_fallthru
          _
        // Predicated region
        $region57: #{tpu_custom_call.1} parent=43 // pred_check
          %p450 = pneg %p221
        $region58: #{tpu_custom_call.1} parent=43 // pred_check_branch
          %452 = sbr.rel (%p450) target = $region60
        $region59: #{tpu_custom_call.1} parent=43 // pred_region
          %s454 = ssub.s32 128, 128
          %455 = vsyncadd %s433, %s454
          %s456 = smul.addr %s29, 128
          %s457 = scalar_lea.hbm %s7, %s456
          %s459 = sshll.u32 %s436, 4
          %s460 = int_to_ptr.vmem [resolvable:$true] %s459
          %462 = dma.vmem_to_hbm [thread:$0]  %s460, 128, %s457, %s433
        $region60: #{tpu_custom_call.1} parent=43 // pred_fallthru
          _
      $region44: #{tpu_custom_call.1} parent=5 // pred_fallthru
        _
      %p463 = scmp.le.s32.totalorder 2, %s20
      // Predicated region
      $region61: #{tpu_custom_call.1} parent=5 // pred_check
        %p464 = pneg %p463
      $region62: #{tpu_custom_call.1} parent=5 // pred_check_branch
        %466 = sbr.rel (%p464) target = $region64
      $region63: #{tpu_custom_call.1} parent=5 // pred_region
        %s467 = ssub.s32 %s20, 2
        // Predicated region
        $region65: #{tpu_custom_call.1} parent=63 // pred_check
          %p468 = pneg %p201
        $region66: #{tpu_custom_call.1} parent=63 // pred_check_branch
          %470 = sbr.rel (%p468) target = $region68
        $region67: #{tpu_custom_call.1} parent=63 // pred_region
          %s471 = sand.u32 %s186, 1
          %s472 = scalar_lea.sflag [#allocation4], %s471
          %s473 = sand.u32 %s186, 1
          %s474 = smul.addr %s473, 8
          %s475 = scalar_lea.vmem [#allocation3], %s474
          %476 = dma.done %s472, 128
        $region68: #{tpu_custom_call.1} parent=63 // pred_fallthru
          _
        // Predicated region
        $region69: #{tpu_custom_call.1} parent=63 // pred_check
          %p477 = pneg %p227
        $region70: #{tpu_custom_call.1} parent=63 // pred_check_branch
          %479 = sbr.rel (%p477) target = $region72
        $region71: #{tpu_custom_call.1} parent=63 // pred_region
          %s480 = sand.u32 %s212, 1
          %s481 = scalar_lea.sflag [#allocation6], %s480
          %s482 = sand.u32 %s212, 1
          %s483 = smul.addr %s482, 8
          %s484 = scalar_lea.vmem [#allocation5], %s483
          %485 = dma.done %s481, 128
        $region72: #{tpu_custom_call.1} parent=63 // pred_fallthru
          _
      $region64: #{tpu_custom_call.1} parent=5 // pred_fallthru
        _
    $region6: #{tpu_custom_call.1} parent=1 // loop_footer
      %s24 = sadd.s32 1, %s20
    $region7: #{tpu_custom_call.1} parent=1 // loop_footer_branch
      %19 = sbr.rel target = $region3
    $region8: #{tpu_custom_call.1} parent=1 // loop_exit
      _
    %486 = vsyncpa [#allocation4], 1
    %s487 = scalar_lea.sflag [#allocation4], 1
    %488 = vsyncpa %s487, 1
    %489 = vsyncpa [#allocation6], 1
    %s490 = scalar_lea.sflag [#allocation6], 1
    %491 = vsyncpa %s490, 1

</llo_original>
